<compile_context>
chip_gen: v6e
topology: v6e:2x2x1
jax: 0.10.0
libtpu: 0.0.40
codegen_flags: <defaults>
</compile_context>

<pallas_src>
import functools

import jax
import jax.numpy as jnp
from jax import lax
from jax.experimental import pallas as pl
from jax.experimental.pallas import tpu as pltpu

_LANES = 128


def _conv_matmul_kernel(p_ref, w_ref, o_ref):
    """One tile of the im2col'd conv: (BM, pack*K_pad) @ (pack*K_pad, pack*Cout).

    Bias is folded into the weights (the LHS carries a 1.0 lane in the K
    padding), so the whole tile is a single lane-dense MXU dot with f32
    accumulation and one unmasked store.
    """
    o_ref[...] = jnp.dot(
        p_ref[...], w_ref[...], preferred_element_type=jnp.float32
    ).astype(o_ref.dtype)


def _round_up(x, m):
    return (x + m - 1) // m * m


@functools.partial(
    jax.jit,
    static_argnames=("tile_pixels", "compute_dtype", "out_dtype", "out_layout",
                     "min_grid_steps"),
)
def nutty_forward(x_nchw, w_oikk, b, *, tile_pixels=8192,
                  compute_dtype=jnp.bfloat16, out_dtype=None,
                  out_layout="NCHW", min_grid_steps=4):
    """Forward pass of Nutty: Conv2d(3, 64, kernel_size=3) on NCHW input."""
    n, cin, h, w = x_nchw.shape
    cout, cin_w, kh, kw = w_oikk.shape
    assert cin == cin_w
    ho, wo = h - kh + 1, w - kw + 1
    if out_dtype is None:
        out_dtype = x_nchw.dtype

    # Pack 4 output pixels per matmul row: LHS lanes = 4*32 = 128 (lane-dense
    # loads), output lanes = 4*64 = 256 (unmasked vst).
    pack = 4
    assert (pack * cout) % _LANES == 0, "output tile must be lane-dense"

    k = cin * kh * kw                     # 27
    k_pad = _round_up(k + 1, 8)           # 32; lane index `k` carries the bias 1.0
    unit = pack * 8                       # tile granularity (sublane alignment)

    m = n * ho * wo
    # Cap the tile so the grid keeps >= min_grid_steps "parallel" steps
    # (megacore on v7x) and tiny inputs aren't padded out to a huge tile.
    tile_cap = _round_up(max(1, -(-m // min_grid_steps)), unit)
    tile_eff = max(unit, min(_round_up(tile_pixels, unit), tile_cap))
    m_pad = _round_up(m, tile_eff)

    # ---- wrapper-side layout plumbing (XLA glue) ----
    # NCHW -> NHWC, then im2col with K ordered (kh, kw, cin) to match weights.
    x_nhwc = jnp.transpose(x_nchw, (0, 2, 3, 1))                   # (N, H, W, Cin)
    pieces = [x_nhwc[:, i:i + ho, j:j + wo, :]
              for i in range(kh) for j in range(kw)]
    patches = jnp.concatenate(pieces, axis=-1).reshape(m, k)        # (M, 27)
    patches = jnp.pad(patches, ((0, m_pad - m), (0, 0)))            # (M_pad, 27)
    bias_lane = jnp.ones((m_pad, 1), patches.dtype)                 # lane k = 1.0
    patches = jnp.concatenate([patches, bias_lane], axis=-1)        # (M_pad, 28)
    patches = jnp.pad(patches, ((0, 0), (0, k_pad - k - 1)))        # (M_pad, 32)
    lhs = patches.astype(compute_dtype).reshape(m_pad // pack, pack * k_pad)

    # Weights: OIHW -> (KH, KW, Cin, Cout) -> (K, Cout); bias goes in the
    # padding row matching the LHS 1.0 lane; block-diagonal pack so one MXU
    # dot emits `pack` pixels.
    w_k = jnp.transpose(w_oikk, (2, 3, 1, 0)).reshape(k, cout)
    w_k = jnp.concatenate(
        [w_k, b.reshape(1, cout),
         jnp.zeros((k_pad - k - 1, cout), w_k.dtype)], axis=0)      # (32, 64)
    w_k = w_k.astype(compute_dtype)
    w_packed = jnp.kron(jnp.eye(pack, dtype=compute_dtype), w_k)    # (128, 256)

    bm = tile_eff // pack                  # packed rows per tile (multiple of 8)
    m2 = m_pad // pack
    grid = (m2 // bm,)

    out_packed = pl.pallas_call(
        _conv_matmul_kernel,
        out_shape=jax.ShapeDtypeStruct((m2, pack * cout), out_dtype),
        grid_spec=pltpu.PrefetchScalarGridSpec(
            num_scalar_prefetch=0,
            grid=grid,
            in_specs=[
                pl.BlockSpec((bm, pack * k_pad), lambda i: (i, 0)),
                pl.BlockSpec((pack * k_pad, pack * cout), lambda i: (0, 0)),
            ],
            out_specs=pl.BlockSpec((bm, pack * cout), lambda i: (i, 0)),
        ),
        compiler_params=pltpu.CompilerParams(
            dimension_semantics=("parallel",),
            vmem_limit_bytes=32 * 1024 * 1024,
        ),
    )(lhs, w_packed)

    # Unpack (cheap reshape/slice): (M2, pack*Cout) -> (N, Ho, Wo, Cout).
    out = out_packed.reshape(m_pad, cout)[:m].reshape(n, ho, wo, cout)
    if out_layout == "NHWC":
        return out
    # PyTorch convention; this transpose is an extra HBM round trip of the
    # output — prefer out_layout="NHWC" when the consumer is layout-agnostic.
    return jnp.transpose(out, (0, 3, 1, 2))


if __name__ == "__main__":
    key = jax.random.PRNGKey(0)
    kx, kwt, kb = jax.random.split(key, 3)

    # Shapes implied by the module: Cin=3, kernel 3x3, Cout=64.
    N, CIN, H, W = 2, 3, 16, 16
    COUT, KH, KW = 64, 3, 3

    x = jax.random.normal(kx, (N, CIN, H, W), dtype=jnp.float32)
    fan_in = CIN * KH * KW
    weight = jax.random.normal(kwt, (COUT, CIN, KH, KW),
                               dtype=jnp.float32) / jnp.sqrt(fan_in)
    bias = jax.random.normal(kb, (COUT,), dtype=jnp.float32) * 0.1

    # Default (PyTorch-equivalent) path: NCHW, f32 output.  At this toy size
    # the auto-cap gives a 4-step parallel grid.
    out = nutty_forward(x, weight, bias)
    out = jax.block_until_ready(out)
    assert out.shape == (N, COUT, H - KH + 1, W - KW + 1)

    # Reference: XLA conv on the same bf16-rounded operands (the kernel does
    # bf16 x bf16 with f32 accumulation; bias is folded into the bf16 weights,
    # so round it the same way).
    xb = x.astype(jnp.bfloat16).astype(jnp.float32)
    wb = weight.astype(jnp.bfloat16).astype(jnp.float32)
    bb = bias.astype(jnp.bfloat16).astype(jnp.float32)
    ref = lax.conv_general_dilated(
        xb, wb, window_strides=(1, 1), padding="VALID",
        dimension_numbers=("NCHW", "OIHW", "NCHW"),
        precision=lax.Precision.HIGHEST,
    ) + bb[None, :, None, None]
    assert jnp.allclose(out, ref, atol=2e-3, rtol=2e-3), \
        float(jnp.max(jnp.abs(out - ref)))

    # Fast path exercised too: NHWC layout + bf16 output (skips the wrapper
    # transpose and halves the output HBM stream).
    out_fast = nutty_forward(x, weight, bias, out_dtype=jnp.bfloat16,
                             out_layout="NHWC")
    out_fast = jax.block_until_ready(out_fast)
    assert out_fast.shape == (N, H - KH + 1, W - KW + 1, COUT)
    ref_nhwc = jnp.transpose(ref, (0, 2, 3, 1))
    diff = jnp.abs(out_fast.astype(jnp.float32) - ref_nhwc)
    assert jnp.allclose(out_fast.astype(jnp.float32), ref_nhwc,
                        atol=3e-2, rtol=3e-2), float(jnp.max(diff))

    print("KERNEL_OK")
</pallas_src>

<mosaic_0001>
module attributes {stable_mosaic.version = 11 : i64} {
  func.func @_conv_matmul_kernel(%arg0: i32, %arg1: memref<32x128xbf16, #tpu.memory_space<vmem>>, %arg2: memref<128x256xbf16, #tpu.memory_space<vmem>>, %arg3: memref<32x256xf32, #tpu.memory_space<vmem>>) attributes {dimension_semantics = [#tpu.dimension_semantics<parallel>], iteration_bounds = array<i64: 4>, scalar_prefetch = 0 : i64, scratch_operands = 0 : i64, tpu.core_type = #tpu.core_type<tc>, window_params = [{transform_indices = @transform_0, window_bounds = array<i64: 32, 128>}, {pipeline_mode = #tpu.pipeline_mode<synchronous>, transform_indices = @transform_1, window_bounds = array<i64: 128, 256>}, {transform_indices = @transform_2, window_bounds = array<i64: 32, 256>}]} {
    %c0 = arith.constant 0 : index
    %c0_0 = arith.constant 0 : index
    %0 = vector.load %arg1[%c0, %c0_0] : memref<32x128xbf16, #tpu.memory_space<vmem>>, vector<32x128xbf16>
    %c0_1 = arith.constant 0 : index
    %c0_2 = arith.constant 0 : index
    %1 = vector.load %arg2[%c0_1, %c0_2] : memref<128x256xbf16, #tpu.memory_space<vmem>>, vector<128x256xbf16>
    %cst = arith.constant dense<0.000000e+00> : vector<32x256xf32>
    %2 = tpu.matmul %0, %1, %cst {dimension_numbers = #tpu.dot_dimension_numbers<[1], [0], [0], [1], [0, 0, 1, 1], [], []>} : vector<32x128xbf16>, vector<128x256xbf16>, vector<32x256xf32> -> vector<32x256xf32>
    %c0_3 = arith.constant 0 : index
    %c0_4 = arith.constant 0 : index
    %3 = vector.load %arg3[%c0_3, %c0_4] : memref<32x256xf32, #tpu.memory_space<vmem>>, vector<32x256xf32>
    tpu.vector_store %arg3[%c0_3, %c0_4], %2 {strides = array<i32>} : memref<32x256xf32, #tpu.memory_space<vmem>>, vector<32x256xf32>,
    return
  }
  func.func @transform_0(%arg0: i32) -> (i32, i32) {
    %c0_i32 = arith.constant 0 : i32
    %c0_i32_0 = arith.constant 0 : i32
    return %arg0, %c0_i32 : i32, i32
  }
  func.func @transform_1(%arg0: i32) -> (i32, i32) {
    %c0_i32 = arith.constant 0 : i32
    %c0_i32_0 = arith.constant 0 : i32
    %c0_i32_1 = arith.constant 0 : i32
    return %c0_i32, %c0_i32_0 : i32, i32
  }
  func.func @transform_2(%arg0: i32) -> (i32, i32) {
    %c0_i32 = arith.constant 0 : i32
    %c0_i32_0 = arith.constant 0 : i32
    return %arg0, %c0_i32 : i32, i32
  }
}

</mosaic_0001>

<llo_original>
// kernel: nutty_forward.1
$region0: #{nutty_forward.1}
  #allocation0 [shape = 'u32[]', space=smem, size = 0x4, offset = 0x4, fixed_abs, tag = 'smem constant byte address 0x4 - core index']
  #allocation1 [shape = 'u32[144,128]{1,0:T(1,128)}', space=vmem, size = 0x12000, scoped, tag = 'internal scratch']
  %s0 = inlined_call_operand.vmem [shape: bf16[128,128], index: 0, kind: input, shape index: {}]
  %s1 = inlined_call_operand.vmem [shape: bf16[128,256], index: 1, kind: input, shape index: {}]
  %s2 = inlined_call_operand.vmem [shape: f32[128,256], index: 2, kind: output, shape index: {}]
  %s3 = sld [smem:[#allocation0]]
  $region41: #{nutty_forward.1} parent=0
    _
  %s5 = ssub.s32 1, %s3
  %s6 = scalar_select 0, %s5, %s3
  loop: start=0, step=1, limit=6
  $region2: #{nutty_forward.1} parent=0 // loop_pre_header
    _
  $region3: #{nutty_forward.1} parent=0 // loop_header
    %s8 = sphi 0, %s12
    %p9 = scmp.ge.s32.totalorder %s8, 6
    %s18 = sphi 0, %s20
    %s21 = sphi 0, %s18
    %s22 = sphi 0, %s21
    %s38 = sphi 0, %s22
    %s42 = sphi 0, %s42
    %s44 = sphi 0, %s42
    %s45 = sphi 0, %s44
    %s59 = sphi 0, %s45
    %s65 = sphi 0, %s67
    %s68 = sphi 0, %s65
    %s69 = sphi 0, %s68
    %s85 = sphi 0, %s69
  $region4: #{nutty_forward.1} parent=0 // loop_header_branch
    %11 = sbr.rel (%p9) target = $region8
  $region5: #{nutty_forward.1} parent=0 // loop_body
    %s13 = ssub.s32 %s8, 1
    %s14 = ssub.s32 %s8, 2
    %s15 = sadd.s32 %s8, 1
    %s16 = ssub.s32 %s8, %s15
    %p17 = scmp.eq.s32.totalorder %s16, 0
    %s19 = sadd.s32 %s18, 1
    %s20 = scalar_select %p17, %s18, %s19
    %p23 = pneg %p17
    %p24 = scmp.eq.s32.totalorder %s8, 3
    %p25 = por %p23, %p24
    %p26 = scmp.ne.s32.totalorder %s18, %s21
    %p27 = scmp.eq.s32.totalorder %s8, 0
    %p28 = por %p26, %p27
    %p29 = scmp.ne.s32.totalorder %s18, %s21
    %p30 = scmp.eq.s32.totalorder %s13, 3
    %p31 = por %p29, %p30
    %p32 = scmp.ne.s32.totalorder %s21, %s22
    %p33 = scmp.eq.s32.totalorder %s13, 0
    %p34 = por %p32, %p33
    %p35 = scmp.ne.s32.totalorder %s21, %s22
    %p36 = scmp.eq.s32.totalorder %s14, 3
    %p37 = por %p35, %p36
    %p39 = scmp.ne.s32.totalorder %s22, %s38
    %p40 = scmp.eq.s32.totalorder %s14, 0
    %p41 = por %p39, %p40
    %s43 = sadd.s32 %s42, 1
    %p46 = scmp.eq.s32.totalorder %s8, 3
    %p47 = scmp.ne.s32.totalorder %s42, %s44
    %p48 = scmp.eq.s32.totalorder %s8, 0
    %p49 = por %p47, %p48
    %p50 = scmp.ne.s32.totalorder %s42, %s44
    %p51 = scmp.eq.s32.totalorder %s13, 3
    %p52 = por %p50, %p51
    %p53 = scmp.ne.s32.totalorder %s44, %s45
    %p54 = scmp.eq.s32.totalorder %s13, 0
    %p55 = por %p53, %p54
    %p56 = scmp.ne.s32.totalorder %s44, %s45
    %p57 = scmp.eq.s32.totalorder %s14, 3
    %p58 = por %p56, %p57
    %p60 = scmp.ne.s32.totalorder %s45, %s59
    %p61 = scmp.eq.s32.totalorder %s14, 0
    %p62 = por %p60, %p61
    %s63 = ssub.s32 %s8, %s15
    %p64 = scmp.eq.s32.totalorder %s63, 0
    %s66 = sadd.s32 %s65, 1
    %s67 = scalar_select %p64, %s65, %s66
    %p70 = pneg %p64
    %p71 = scmp.eq.s32.totalorder %s8, 3
    %p72 = por %p70, %p71
    %p73 = scmp.ne.s32.totalorder %s65, %s68
    %p74 = scmp.eq.s32.totalorder %s8, 0
    %p75 = por %p73, %p74
    %p76 = scmp.ne.s32.totalorder %s65, %s68
    %p77 = scmp.eq.s32.totalorder %s13, 3
    %p78 = por %p76, %p77
    %p79 = scmp.ne.s32.totalorder %s68, %s69
    %p80 = scmp.eq.s32.totalorder %s13, 0
    %p81 = por %p79, %p80
    %p82 = scmp.ne.s32.totalorder %s68, %s69
    %p83 = scmp.eq.s32.totalorder %s14, 3
    %p84 = por %p82, %p83
    %p86 = scmp.ne.s32.totalorder %s69, %s85
    %p87 = scmp.eq.s32.totalorder %s14, 0
    %p88 = por %p86, %p87
    %p89 = scmp.le.s32.totalorder 1, %s8
    %p90 = scmp.lt.s32.totalorder %s8, 5
    %p91 = pnand %p89, %p90
    %p92 = pneg %p91
    // Predicated region
    $region9: #{nutty_forward.1} parent=5 // pred_check
      _
    $region10: #{nutty_forward.1} parent=5 // pred_check_branch
      %94 = sbr.rel (%p91) target = $region12
    $region11: #{nutty_forward.1} parent=5 // pred_region
      %s95 = ssub.s32 %s8, 1
      // Predicated region
      $region13: #{nutty_forward.1} parent=11 // pred_check
        %p96 = pneg %p55
      $region14: #{nutty_forward.1} parent=11 // pred_check_branch
        %98 = sbr.rel (%p96) target = $region16
      $region15: #{nutty_forward.1} parent=11 // pred_region
        _
      $region16: #{nutty_forward.1} parent=11 // pred_fallthru
        _
    $region12: #{nutty_forward.1} parent=5 // pred_fallthru
      _
    %p99 = scmp.lt.s32.totalorder %s8, 4
    // Predicated region
    $region17: #{nutty_forward.1} parent=5 // pred_check
      %p100 = pneg %p99
    $region18: #{nutty_forward.1} parent=5 // pred_check_branch
      %102 = sbr.rel (%p100) target = $region20
    $region19: #{nutty_forward.1} parent=5 // pred_region
      // Predicated region
      $region21: #{nutty_forward.1} parent=19 // pred_check
        %p103 = pneg %p28
      $region22: #{nutty_forward.1} parent=19 // pred_check_branch
        %105 = sbr.rel (%p103) target = $region24
      $region23: #{nutty_forward.1} parent=19 // pred_region
        %s106 = smul.u32 4, %s8
        %p107 = scmp.lt.s32.totalorder %s106, 15
        %s108 = scalar_select %p107, %s106, 15
        %s109 = smul.addr %s108, 4
        %s110 = scalar_lea.vmem %s0, %s109
        %s111 = smul.u32 4, %s8
      $region24: #{nutty_forward.1} parent=19 // pred_fallthru
        _
    $region20: #{nutty_forward.1} parent=5 // pred_fallthru
      _
    %p112 = scmp.le.s32.totalorder 1, %s8
    %p113 = scmp.lt.s32.totalorder %s8, 5
    %p114 = pnand %p112, %p113
    %p115 = pneg %p114
    // Predicated region
    $region25: #{nutty_forward.1} parent=5 // pred_check
      _
    $region26: #{nutty_forward.1} parent=5 // pred_check_branch
      %117 = sbr.rel (%p114) target = $region28
    $region27: #{nutty_forward.1} parent=5 // pred_region
      %s118 = ssub.s32 %s8, 1
      %s119 = smul.u32 4, %s13
      %p120 = scmp.lt.s32.totalorder %s119, 15
      %s121 = scalar_select %p120, %s119, 15
      %s122 = smul.addr %s121, 4
      %s123 = scalar_lea.vmem %s0, %s122
      %p124 = pneg %p34
      %p125 = pneg %p31
      %p126 = pneg %p55
      %p127 = pneg %p52
      %p128 = pneg %p81
      %p129 = pneg %p78
      %s130 = smul.u32 4, %s13
      %p131 = scmp.lt.s32.totalorder %s130, 15
      %s132 = scalar_select %p131, %s130, 15
      %s133 = smul.addr %s132, 2
      %s134 = smul.addr %s133, 8
      %s135 = scalar_lea.vmem %s2, %s134
      %s136 = smul.u32 4, %s13
      %p137 = scmp.lt.s32.totalorder %s136, 15
      %s138 = scalar_select %p137, %s136, 15
      %s139 = smul.addr %s138, 4
      %s140 = scalar_lea.vmem %s0, %s139
      %s141 = smul.u32 4, %s13
      %s142 = smul.u32 4, %s13
      %p143 = scmp.lt.s32.totalorder %s142, 15
      %s144 = scalar_select %p143, %s142, 15
      %s145 = smul.addr %s144, 2
      %s146 = smul.addr %s145, 8
      %s147 = scalar_lea.vmem %s2, %s146
      %s148 = smul.u32 4, %s13
      %v150 = vld [vmem:[%s140] sm:$0xf]
      %v151 = vld [vmem:[%s140 + $0x4] sm:$0xf]
      %v152 = vld [vmem:[%s140 + $0x8] sm:$0xf]
      %v153 = vld [vmem:[%s140 + $0xc] sm:$0xf]
      %v154 = vld [vmem:[%s1] sm:$0xff]
      %v155 = vld [vmem:[%s1 + $0x8] sm:$0xff]
      %v156 = vld [vmem:[%s1 + $0x10] sm:$0xff]
      %v157 = vld [vmem:[%s1 + $0x18] sm:$0xff]
      %v158 = vld [vmem:[%s1 + $0x20] sm:$0xff]
      %v159 = vld [vmem:[%s1 + $0x28] sm:$0xff]
      %v160 = vld [vmem:[%s1 + $0x30] sm:$0xff]
      %v161 = vld [vmem:[%s1 + $0x38] sm:$0xff]
      %v162 = vld [vmem:[%s1 + $0x40] sm:$0xff]
      %v163 = vld [vmem:[%s1 + $0x48] sm:$0xff]
      %v164 = vld [vmem:[%s1 + $0x50] sm:$0xff]
      %v165 = vld [vmem:[%s1 + $0x58] sm:$0xff]
      %v166 = vld [vmem:[%s1 + $0x60] sm:$0xff]
      %v167 = vld [vmem:[%s1 + $0x68] sm:$0xff]
      %v168 = vld [vmem:[%s1 + $0x70] sm:$0xff]
      %v169 = vld [vmem:[%s1 + $0x78] sm:$0xff]
      %v174 = vunpack.c.l.b16 %v150
      %v175 = vunpack.c.l.b16 %v151
      %v176 = vunpack.c.l.b16 %v152
      %v177 = vunpack.c.l.b16 %v153
      %v178 = vpack.c.b16 %v175, %v174
      %v179 = vpack.c.b16 %v177, %v176
      %v198 = vunpack.c.l.b16 %v154
      %v199 = vunpack.c.h.b16 %v154
      %v200 = vunpack.c.l.b16 %v155
      %v201 = vunpack.c.h.b16 %v155
      %v202 = vunpack.c.l.b16 %v156
      %v203 = vunpack.c.h.b16 %v156
      %v204 = vunpack.c.l.b16 %v157
      %v205 = vunpack.c.h.b16 %v157
      %v206 = vunpack.c.l.b16 %v158
      %v207 = vunpack.c.h.b16 %v158
      %v208 = vunpack.c.l.b16 %v159
      %v209 = vunpack.c.h.b16 %v159
      %v210 = vunpack.c.l.b16 %v160
      %v211 = vunpack.c.h.b16 %v160
      %v212 = vunpack.c.l.b16 %v161
      %v213 = vunpack.c.h.b16 %v161
      %v214 = vunpack.c.l.b16 %v162
      %v215 = vunpack.c.h.b16 %v162
      %v216 = vunpack.c.l.b16 %v163
      %v217 = vunpack.c.h.b16 %v163
      %v218 = vunpack.c.l.b16 %v164
      %v219 = vunpack.c.h.b16 %v164
      %v220 = vunpack.c.l.b16 %v165
      %v221 = vunpack.c.h.b16 %v165
      %v222 = vunpack.c.l.b16 %v166
      %v223 = vunpack.c.h.b16 %v166
      %v224 = vunpack.c.l.b16 %v167
      %v225 = vunpack.c.h.b16 %v167
      %v226 = vunpack.c.l.b16 %v168
      %v227 = vunpack.c.h.b16 %v168
      %v228 = vunpack.c.l.b16 %v169
      %v229 = vunpack.c.h.b16 %v169
      %v230 = vpack.c.b16 %v200, %v198
      %v231 = vpack.c.b16 %v201, %v199
      %v232 = vpack.c.b16 %v204, %v202
      %v233 = vpack.c.b16 %v205, %v203
      %v234 = vpack.c.b16 %v208, %v206
      %v235 = vpack.c.b16 %v209, %v207
      %v236 = vpack.c.b16 %v212, %v210
      %v237 = vpack.c.b16 %v213, %v211
      %v238 = vpack.c.b16 %v216, %v214
      %v239 = vpack.c.b16 %v217, %v215
      %v240 = vpack.c.b16 %v220, %v218
      %v241 = vpack.c.b16 %v221, %v219
      %v242 = vpack.c.b16 %v224, %v222
      %v243 = vpack.c.b16 %v225, %v223
      %v244 = vpack.c.b16 %v228, %v226
      %v245 = vpack.c.b16 %v229, %v227
      %262 = vmatprep.subr.bf16.mxu0 %v245
      %263 = vmatpush1.bf16.msra.mxu0 %v244
      %264 = vmatprep.subr.bf16.mxu0 %v243
      %265 = vmatpush1.bf16.msra.mxu0 %v242
      %266 = vmatprep.subr.bf16.mxu0 %v241
      %267 = vmatpush1.bf16.msra.mxu0 %v240
      %268 = vmatprep.subr.bf16.mxu0 %v239
      %269 = vmatpush1.bf16.msra.mxu0 %v238
      %270 = vmatprep.subr.bf16.mxu0 %v237
      %271 = vmatpush1.bf16.msra.mxu0 %v236
      %272 = vmatprep.subr.bf16.mxu0 %v235
      %273 = vmatpush1.bf16.msra.mxu0 %v234
      %274 = vmatprep.subr.bf16.mxu0 %v233
      %275 = vmatpush1.bf16.msra.mxu0 %v232
      %276 = vmatprep.subr.bf16.mxu0 %v231
      %277 = vmatpush1.bf16.msra.mxu0 %v230
      %278 = vmatprep.subr.bf16.mxu0 0
      %279 = vmatpush2.bf16.msra.mxu0 0
      %280 = vmatprep.subr.bf16.mxu0 0
      %281 = vmatpush2.bf16.msra.mxu0 0
      %282 = vmatprep.subr.bf16.mxu0 0
      %283 = vmatpush2.bf16.msra.mxu0 0
      %284 = vmatprep.subr.bf16.mxu0 0
      %285 = vmatpush2.bf16.msra.mxu0 0
      %286 = vmatprep.subr.bf16.mxu0 0
      %287 = vmatpush2.bf16.msra.mxu0 0
      %288 = vmatprep.subr.bf16.mxu0 0
      %289 = vmatpush2.bf16.msra.mxu0 0
      %290 = vmatprep.subr.bf16.mxu0 0
      %291 = vmatpush2.bf16.msra.mxu0 0
      %292 = vmatprep.subr.bf16.mxu0 0
      %293 = vmatpush2.bf16.msra.mxu0 0
      %294 = vmatprep.mubr.bf16.mxu0 0
      %295 = vmatmul.mubr.bf16.gmra.mxu0 %v178
      %v296 = vpop.f32.mrf.mxu0
      %v297 = vadd.f32 0.0, %v296
      %v298 = vpop.f32.mrf.mxu0
      %v299 = vadd.f32 0.0, %v298
      %v300 = vpop.f32.mrf.mxu0
      %v301 = vadd.f32 0.0, %v300
      %v302 = vpop.f32.mrf.mxu0
      %v303 = vadd.f32 0.0, %v302
      %304 = vmatprep.mubr.bf16.mxu0 0
      %305 = vmatmul.mubr.bf16.gmra.mxu0 %v179
      %v306 = vpop.f32.mrf.mxu0
      %v307 = vadd.f32 0.0, %v306
      %v308 = vpop.f32.mrf.mxu0
      %v309 = vadd.f32 0.0, %v308
      %v310 = vpop.f32.mrf.mxu0
      %v311 = vadd.f32 0.0, %v310
      %v312 = vpop.f32.mrf.mxu0
      %v313 = vadd.f32 0.0, %v312
      %314 = vdwg.mxu0
      %315 = vst [vmem:[%s147] sm:$0xff] %v297
      %316 = vst [vmem:[%s147 + $0x8] sm:$0xff] %v299
      %317 = vst [vmem:[%s147 + $0x10] sm:$0xff] %v301
      %318 = vst [vmem:[%s147 + $0x18] sm:$0xff] %v303
      %319 = vst [vmem:[%s147 + $0x20] sm:$0xff] %v307
      %320 = vst [vmem:[%s147 + $0x28] sm:$0xff] %v309
      %321 = vst [vmem:[%s147 + $0x30] sm:$0xff] %v311
      %322 = vst [vmem:[%s147 + $0x38] sm:$0xff] %v313
      %s323 = smul.u32 4, %s13
      %p324 = scmp.lt.s32.totalorder %s323, 15
      %s325 = scalar_select %p324, %s323, 15
      %s326 = smul.addr %s325, 2
      %s327 = smul.addr %s326, 8
      %s328 = scalar_lea.vmem %s2, %s327
      // Predicated region
      $region29: #{nutty_forward.1} parent=27 // pred_check
        %p329 = pneg %p78
      $region30: #{nutty_forward.1} parent=27 // pred_check_branch
        %331 = sbr.rel (%p329) target = $region32
      $region31: #{nutty_forward.1} parent=27 // pred_region
        %s332 = smul.u32 4, %s13
      $region32: #{nutty_forward.1} parent=27 // pred_fallthru
        _
    $region28: #{nutty_forward.1} parent=5 // pred_fallthru
      _
    %p333 = scmp.le.s32.totalorder 2, %s8
    // Predicated region
    $region33: #{nutty_forward.1} parent=5 // pred_check
      %p334 = pneg %p333
    $region34: #{nutty_forward.1} parent=5 // pred_check_branch
      %336 = sbr.rel (%p334) target = $region36
    $region35: #{nutty_forward.1} parent=5 // pred_region
      %s337 = ssub.s32 %s8, 2
      // Predicated region
      $region37: #{nutty_forward.1} parent=35 // pred_check
        %p338 = pneg %p84
      $region38: #{nutty_forward.1} parent=35 // pred_check_branch
        %340 = sbr.rel (%p338) target = $region40
      $region39: #{nutty_forward.1} parent=35 // pred_region
        %s341 = smul.u32 4, %s14
        %p342 = scmp.lt.s32.totalorder %s341, 15
        %s343 = scalar_select %p342, %s341, 15
        %s344 = smul.addr %s343, 2
        %s345 = smul.addr %s344, 8
        %s346 = scalar_lea.vmem %s2, %s345
      $region40: #{nutty_forward.1} parent=35 // pred_fallthru
        _
    $region36: #{nutty_forward.1} parent=5 // pred_fallthru
      _
  $region6: #{nutty_forward.1} parent=0 // loop_footer
    %s12 = sadd.s32 1, %s8
  $region7: #{nutty_forward.1} parent=0 // loop_footer_branch
    %7 = sbr.rel target = $region3
  $region8: #{nutty_forward.1} parent=0 // loop_exit
    _

</llo_original>
